<compile_context>
chip_gen: v7x
topology: tpu7x:2x2x1
jax: 0.10.0
libtpu: 0.0.40
codegen_flags: <defaults>
</compile_context>

<pallas_src>
import functools

import jax
import jax.numpy as jnp
from jax.experimental import pallas as pl
from jax.experimental.pallas import tpu as pltpu


def _round_up(x, m):
    return (x + m - 1) // m * m


def _pick_tile_b():
    """Default batch tile per generation (static, wrapper-side only)."""
    try:
        kind = jax.devices()[0].device_kind.lower()
    except Exception:
        return 1024
    # v5e: 128-deep MXU, single vst slot, tighter vreg budget -> smaller tile.
    if "v5 lite" in kind or "v5e" in kind:
        return 512
    return 1024


# --------------------------------------------------------------------------
# Kernel: fused 3-layer MLP with split-K first matmul (in-kernel "concat").
# --------------------------------------------------------------------------
def q_critic_kernel(s_ref, a_ref, w1s_ref, w1a_ref, b1_ref,
                    w2_ref, b2_ref, w3_ref, b3_ref, out_ref):
    bf16 = jnp.bfloat16
    s = s_ref[...].astype(bf16)
    a = a_ref[...].astype(bf16)

    # Layer 1: cat([s, a]) @ W1  ==  s @ W1s + a @ W1a   (f32 accumulate).
    h1 = jnp.dot(s, w1s_ref[...], preferred_element_type=jnp.float32)
    h1 = h1 + jnp.dot(a, w1a_ref[...], preferred_element_type=jnp.float32)
    h1 = jnp.maximum(h1 + b1_ref[...], 0.0).astype(bf16)

    # Layer 2.
    h2 = jnp.dot(h1, w2_ref[...], preferred_element_type=jnp.float32)
    h2 = jnp.maximum(h2 + b2_ref[...], 0.0).astype(bf16)

    # Layer 3: single output column, stored directly (no lane padding).
    q = jnp.dot(h2, w3_ref[...], preferred_element_type=jnp.float32)
    out_ref[...] = q + b3_ref[...]


# --------------------------------------------------------------------------
# Wrapper
# --------------------------------------------------------------------------
@functools.partial(jax.jit, static_argnames=("tile_b",))
def q_critic_forward(state, action, kernel_params, *, tile_b=None):
    """state: [B, sd] f32, action: [B, ad] f32 -> q: [B, 1] f32."""
    if tile_b is None:
        tile_b = _pick_tile_b()

    w1s, w1a, b1, w2, b2, w3, b3 = kernel_params
    B, sd = state.shape
    ad = action.shape[1]
    H1 = w1s.shape[1]
    H2 = w2.shape[1]
    HO = w3.shape[1]          # == 1 (no lane padding on the output)

    # Balanced batch tiles: at least 2 grid steps (v7x has 2 TensorCores),
    # each a multiple of 8 sublanes, with < 8 rows of padding per tile.
    pb8 = _round_up(B, 8)
    min_tiles = 2 if pb8 >= 16 else 1
    n_tiles = max(pl.cdiv(pb8, tile_b), min_tiles)
    tb = _round_up(pl.cdiv(pb8, n_tiles), 8)
    pb = n_tiles * tb
    if pb != B:
        state = jnp.pad(state, ((0, pb - B), (0, 0)))
        action = jnp.pad(action, ((0, pb - B), (0, 0)))

    batched = lambda f: pl.BlockSpec((tb, f), lambda i: (i, 0))
    resident = lambda shp: pl.BlockSpec(shp, lambda i: (0, 0))

    out = pl.pallas_call(
        q_critic_kernel,
        out_shape=jax.ShapeDtypeStruct((pb, HO), jnp.float32),
        grid_spec=pltpu.PrefetchScalarGridSpec(
            num_scalar_prefetch=0,
            grid=(n_tiles,),
            in_specs=[
                batched(sd),                 # state tile
                batched(ad),                 # action tile
                resident((sd, H1)),          # W1_state (bf16)
                resident((ad, H1)),          # W1_action (bf16)
                resident((1, H1)),           # b1 (f32)
                resident((H1, H2)),          # W2 (bf16)
                resident((1, H2)),           # b2 (f32)
                resident((H2, HO)),          # W3 (bf16)
                resident((1, HO)),           # b3 (f32)
            ],
            out_specs=batched(HO),
        ),
        compiler_params=pltpu.CompilerParams(
            dimension_semantics=("parallel",),
            vmem_limit_bytes=32 * 1024 * 1024,
        ),
    )(state, action, w1s, w1a, b1, w2, b2, w3, b3)

    # Strip only the batch padding; output has exactly one column already.
    return out[:B]


# --------------------------------------------------------------------------
# Parameter construction
# --------------------------------------------------------------------------
def init_params(key, state_dim, action_dim, net_width):
    """PyTorch nn.Linear-style init, weights stored [in, out] (== W.T)."""
    dims = [(state_dim + action_dim, net_width), (net_width, 300), (300, 1)]
    params = []
    for fan_in, fan_out in dims:
        key, kw, kb = jax.random.split(key, 3)
        bound = 1.0 / jnp.sqrt(jnp.float32(fan_in))
        w = jax.random.uniform(kw, (fan_in, fan_out), jnp.float32,
                               minval=-bound, maxval=bound)
        b = jax.random.uniform(kb, (fan_out,), jnp.float32,
                               minval=-bound, maxval=bound)
        params += [w, b]
    return tuple(params)


def prepare_kernel_params(params, state_dim):
    """Split W1, zero-pad hidden dims to multiples of 128, cast weights bf16.

    Zero padding keeps numerics exact: padded hidden lanes are relu(0 + 0) = 0
    and padded W rows are 0, so they contribute nothing to the single output
    column.  The output itself is NOT padded ([*, 1]).
    """
    w1, b1, w2, b2, w3, b3 = params
    H1 = _round_up(w1.shape[1], 128)     # 64  -> 128
    H2 = _round_up(w2.shape[1], 128)     # 300 -> 384
    HO = w3.shape[1]                     # 1   (no lane padding)

    def pad2(x, rows, cols):
        return jnp.pad(x, ((0, rows - x.shape[0]), (0, cols - x.shape[1])))

    bf16 = jnp.bfloat16
    w1s = pad2(w1[:state_dim], state_dim, H1).astype(bf16)
    w1a = pad2(w1[state_dim:], w1.shape[0] - state_dim, H1).astype(bf16)
    b1p = pad2(b1.reshape(1, -1), 1, H1)                      # f32
    w2p = pad2(w2, H1, H2).astype(bf16)
    b2p = pad2(b2.reshape(1, -1), 1, H2)                      # f32
    w3p = pad2(w3, H2, HO).astype(bf16)
    b3p = b3.reshape(1, -1).astype(jnp.float32)               # (1, 1)
    return (w1s, w1a, b1p, w2p, b2p, w3p, b3p)


# --------------------------------------------------------------------------
# References
# --------------------------------------------------------------------------
def q_critic_ref_f32(state, action, params):
    """Pure f32 reference (PyTorch semantics)."""
    w1, b1, w2, b2, w3, b3 = params
    sa = jnp.concatenate([state, action], axis=1)
    q = jax.nn.relu(sa @ w1 + b1)
    q = jax.nn.relu(q @ w2 + b2)
    return q @ w3 + b3


def q_critic_ref_mixed(state, action, params):
    """Reference mimicking the kernel's bf16-operand / f32-accum precision."""
    w1, b1, w2, b2, w3, b3 = params
    bf16 = jnp.bfloat16
    sa = jnp.concatenate([state, action], axis=1).astype(bf16)
    h = jnp.dot(sa, w1.astype(bf16), preferred_element_type=jnp.float32)
    h = jax.nn.relu(h + b1).astype(bf16)
    h = jnp.dot(h, w2.astype(bf16), preferred_element_type=jnp.float32)
    h = jax.nn.relu(h + b2).astype(bf16)
    return jnp.dot(h, w3.astype(bf16), preferred_element_type=jnp.float32) + b3


# --------------------------------------------------------------------------
if __name__ == "__main__":
    batch, state_dim, action_dim, net_width = 32, 17, 6, 64

    key = jax.random.PRNGKey(0)
    k_s, k_a, k_p = jax.random.split(key, 3)
    state = jax.random.normal(k_s, (batch, state_dim), jnp.float32)
    action = jax.random.normal(k_a, (batch, action_dim), jnp.float32)

    params = init_params(k_p, state_dim, action_dim, net_width)
    kernel_params = prepare_kernel_params(params, state_dim)

    q = q_critic_forward(state, action, kernel_params)
    jax.block_until_ready(q)
    assert q.shape == (batch, 1), q.shape

    # Tight check vs a reference at the kernel's own (bf16-in, f32-acc) precision.
    q_mixed = q_critic_ref_mixed(state, action, params)
    assert jnp.allclose(q, q_mixed, atol=2e-3, rtol=2e-3), (
        float(jnp.max(jnp.abs(q - q_mixed))))

    # Coarse check vs the full-f32 PyTorch-equivalent forward.
    q_f32 = q_critic_ref_f32(state, action, params)
    assert jnp.allclose(q, q_f32, atol=3e-2, rtol=3e-2), (
        float(jnp.max(jnp.abs(q - q_f32))))

    print("KERNEL_OK")
</pallas_src>

<mosaic_0001>
module attributes {stable_mosaic.version = 11 : i64} {
  func.func @q_critic_kernel(%arg0: i32, %arg1: memref<16x17xf32, #tpu.memory_space<vmem>>, %arg2: memref<16x6xf32, #tpu.memory_space<vmem>>, %arg3: memref<17x128xbf16, #tpu.memory_space<vmem>>, %arg4: memref<6x128xbf16, #tpu.memory_space<vmem>>, %arg5: memref<1x128xf32, #tpu.memory_space<vmem>>, %arg6: memref<128x384xbf16, #tpu.memory_space<vmem>>, %arg7: memref<1x384xf32, #tpu.memory_space<vmem>>, %arg8: memref<384x1xbf16, #tpu.memory_space<vmem>>, %arg9: memref<1x1xf32, #tpu.memory_space<vmem>>, %arg10: memref<16x1xf32, #tpu.memory_space<vmem>>) attributes {dimension_semantics = [#tpu.dimension_semantics<parallel>], iteration_bounds = array<i64: 2>, scalar_prefetch = 0 : i64, scratch_operands = 0 : i64, tpu.core_type = #tpu.core_type<tc>, window_params = [{transform_indices = @transform_0, window_bounds = array<i64: 16, 17>}, {transform_indices = @transform_1, window_bounds = array<i64: 16, 6>}, {pipeline_mode = #tpu.pipeline_mode<synchronous>, transform_indices = @transform_2, window_bounds = array<i64: 17, 128>}, {pipeline_mode = #tpu.pipeline_mode<synchronous>, transform_indices = @transform_3, window_bounds = array<i64: 6, 128>}, {pipeline_mode = #tpu.pipeline_mode<synchronous>, transform_indices = @transform_4, window_bounds = array<i64: 1, 128>}, {pipeline_mode = #tpu.pipeline_mode<synchronous>, transform_indices = @transform_5, window_bounds = array<i64: 128, 384>}, {pipeline_mode = #tpu.pipeline_mode<synchronous>, transform_indices = @transform_6, window_bounds = array<i64: 1, 384>}, {pipeline_mode = #tpu.pipeline_mode<synchronous>, transform_indices = @transform_7, window_bounds = array<i64: 384, 1>}, {pipeline_mode = #tpu.pipeline_mode<synchronous>, transform_indices = @transform_8, window_bounds = array<i64: 1, 1>}, {transform_indices = @transform_9, window_bounds = array<i64: 16, 1>}]} {
    %c0 = arith.constant 0 : index
    %c0_0 = arith.constant 0 : index
    %0 = vector.load %arg1[%c0, %c0_0] : memref<16x17xf32, #tpu.memory_space<vmem>>, vector<16x17xf32>
    %1 = arith.truncf %0 : vector<16x17xf32> to vector<16x17xbf16>
    %c0_1 = arith.constant 0 : index
    %c0_2 = arith.constant 0 : index
    %2 = vector.load %arg2[%c0_1, %c0_2] : memref<16x6xf32, #tpu.memory_space<vmem>>, vector<16x6xf32>
    %3 = arith.truncf %2 : vector<16x6xf32> to vector<16x6xbf16>
    %c0_3 = arith.constant 0 : index
    %c0_4 = arith.constant 0 : index
    %4 = vector.load %arg3[%c0_3, %c0_4] : memref<17x128xbf16, #tpu.memory_space<vmem>>, vector<17x128xbf16>
    %cst = arith.constant dense<0.000000e+00> : vector<16x128xf32>
    %5 = tpu.matmul %1, %4, %cst {dimension_numbers = #tpu.dot_dimension_numbers<[1], [0], [0], [1], [0, 0, 1, 1], [], []>} : vector<16x17xbf16>, vector<17x128xbf16>, vector<16x128xf32> -> vector<16x128xf32>
    %c0_5 = arith.constant 0 : index
    %c0_6 = arith.constant 0 : index
    %6 = vector.load %arg4[%c0_5, %c0_6] : memref<6x128xbf16, #tpu.memory_space<vmem>>, vector<6x128xbf16>
    %cst_7 = arith.constant dense<0.000000e+00> : vector<16x128xf32>
    %7 = tpu.matmul %3, %6, %cst_7 {dimension_numbers = #tpu.dot_dimension_numbers<[1], [0], [0], [1], [0, 0, 1, 1], [], []>} : vector<16x6xbf16>, vector<6x128xbf16>, vector<16x128xf32> -> vector<16x128xf32>
    %8 = arith.addf %5, %7 : vector<16x128xf32>
    %c0_8 = arith.constant 0 : index
    %c0_9 = arith.constant 0 : index
    %9 = vector.load %arg5[%c0_8, %c0_9] : memref<1x128xf32, #tpu.memory_space<vmem>>, vector<1x128xf32>
    %10 = vector.broadcast %9 : vector<1x128xf32> to vector<16x128xf32>
    %11 = arith.addf %8, %10 : vector<16x128xf32>
    %cst_10 = arith.constant 0.000000e+00 : f32
    %12 = vector.broadcast %cst_10 : f32 to vector<16x128xf32>
    %13 = arith.maximumf %11, %12 : vector<16x128xf32>
    %14 = arith.truncf %13 : vector<16x128xf32> to vector<16x128xbf16>
    %c0_11 = arith.constant 0 : index
    %c0_12 = arith.constant 0 : index
    %15 = vector.load %arg6[%c0_11, %c0_12] : memref<128x384xbf16, #tpu.memory_space<vmem>>, vector<128x384xbf16>
    %cst_13 = arith.constant dense<0.000000e+00> : vector<16x384xf32>
    %16 = tpu.matmul %14, %15, %cst_13 {dimension_numbers = #tpu.dot_dimension_numbers<[1], [0], [0], [1], [0, 0, 1, 1], [], []>} : vector<16x128xbf16>, vector<128x384xbf16>, vector<16x384xf32> -> vector<16x384xf32>
    %c0_14 = arith.constant 0 : index
    %c0_15 = arith.constant 0 : index
    %17 = vector.load %arg7[%c0_14, %c0_15] : memref<1x384xf32, #tpu.memory_space<vmem>>, vector<1x384xf32>
    %18 = vector.broadcast %17 : vector<1x384xf32> to vector<16x384xf32>
    %19 = arith.addf %16, %18 : vector<16x384xf32>
    %cst_16 = arith.constant 0.000000e+00 : f32
    %20 = vector.broadcast %cst_16 : f32 to vector<16x384xf32>
    %21 = arith.maximumf %19, %20 : vector<16x384xf32>
    %22 = arith.truncf %21 : vector<16x384xf32> to vector<16x384xbf16>
    %c0_17 = arith.constant 0 : index
    %c0_18 = arith.constant 0 : index
    %23 = vector.load %arg8[%c0_17, %c0_18] : memref<384x1xbf16, #tpu.memory_space<vmem>>, vector<384x1xbf16>
    %cst_19 = arith.constant dense<0.000000e+00> : vector<16x1xf32>
    %24 = tpu.matmul %22, %23, %cst_19 {dimension_numbers = #tpu.dot_dimension_numbers<[1], [0], [0], [1], [0, 0, 1, 1], [], []>} : vector<16x384xbf16>, vector<384x1xbf16>, vector<16x1xf32> -> vector<16x1xf32>
    %c0_20 = arith.constant 0 : index
    %c0_21 = arith.constant 0 : index
    %25 = vector.load %arg9[%c0_20, %c0_21] : memref<1x1xf32, #tpu.memory_space<vmem>>, vector<1x1xf32>
    %26 = vector.broadcast %25 : vector<1x1xf32> to vector<16x1xf32>
    %27 = arith.addf %24, %26 : vector<16x1xf32>
    %c0_22 = arith.constant 0 : index
    %c0_23 = arith.constant 0 : index
    %28 = vector.load %arg10[%c0_22, %c0_23] : memref<16x1xf32, #tpu.memory_space<vmem>>, vector<16x1xf32>
    tpu.vector_store %arg10[%c0_22, %c0_23], %27 {strides = array<i32>} : memref<16x1xf32, #tpu.memory_space<vmem>>, vector<16x1xf32>,
    return
  }
  func.func @transform_0(%arg0: i32) -> (i32, i32) {
    %c0_i32 = arith.constant 0 : i32
    %c0_i32_0 = arith.constant 0 : i32
    return %arg0, %c0_i32 : i32, i32
  }
  func.func @transform_1(%arg0: i32) -> (i32, i32) {
    %c0_i32 = arith.constant 0 : i32
    %c0_i32_0 = arith.constant 0 : i32
    return %arg0, %c0_i32 : i32, i32
  }
  func.func @transform_2(%arg0: i32) -> (i32, i32) {
    %c0_i32 = arith.constant 0 : i32
    %c0_i32_0 = arith.constant 0 : i32
    %c0_i32_1 = arith.constant 0 : i32
    return %c0_i32, %c0_i32_0 : i32, i32
  }
  func.func @transform_3(%arg0: i32) -> (i32, i32) {
    %c0_i32 = arith.constant 0 : i32
    %c0_i32_0 = arith.constant 0 : i32
    %c0_i32_1 = arith.constant 0 : i32
    return %c0_i32, %c0_i32_0 : i32, i32
  }
  func.func @transform_4(%arg0: i32) -> (i32, i32) {
    %c0_i32 = arith.constant 0 : i32
    %c0_i32_0 = arith.constant 0 : i32
    %c0_i32_1 = arith.constant 0 : i32
    return %c0_i32, %c0_i32_0 : i32, i32
  }
  func.func @transform_5(%arg0: i32) -> (i32, i32) {
    %c0_i32 = arith.constant 0 : i32
    %c0_i32_0 = arith.constant 0 : i32
    %c0_i32_1 = arith.constant 0 : i32
    return %c0_i32, %c0_i32_0 : i32, i32
  }
  func.func @transform_6(%arg0: i32) -> (i32, i32) {
    %c0_i32 = arith.constant 0 : i32
    %c0_i32_0 = arith.constant 0 : i32
    %c0_i32_1 = arith.constant 0 : i32
    return %c0_i32, %c0_i32_0 : i32, i32
  }
  func.func @transform_7(%arg0: i32) -> (i32, i32) {
    %c0_i32 = arith.constant 0 : i32
    %c0_i32_0 = arith.constant 0 : i32
    %c0_i32_1 = arith.constant 0 : i32
    return %c0_i32, %c0_i32_0 : i32, i32
  }
  func.func @transform_8(%arg0: i32) -> (i32, i32) {
    %c0_i32 = arith.constant 0 : i32
    %c0_i32_0 = arith.constant 0 : i32
    %c0_i32_1 = arith.constant 0 : i32
    return %c0_i32, %c0_i32_0 : i32, i32
  }
  func.func @transform_9(%arg0: i32) -> (i32, i32) {
    %c0_i32 = arith.constant 0 : i32
    %c0_i32_0 = arith.constant 0 : i32
    return %arg0, %c0_i32 : i32, i32
  }
}

</mosaic_0001>

<llo_original>
// kernel: q_critic_forward.1
$region0: #{q_critic_forward.1}
  #allocation0 [shape = 'u32[]', space=smem, size = 0x4, offset = 0x4, fixed_abs, tag = 'smem constant byte address 0x4 - core index']
  #allocation1 [shape = 'u32[144,128]{1,0:T(1,128)}', space=vmem, size = 0x12000, scoped, tag = 'internal scratch']
  #allocation2 [shape = 'f32[1,1]{1,0:T(1,128)S(1)}', space=vmem, size = 0x200, scoped, tag = 'scoped memory for q_critic_forward.1']
  %s0 = inlined_call_operand.vmem [shape: f32[32,17], index: 0, kind: input, shape index: {}]
  %s1 = inlined_call_operand.vmem [shape: f32[32,6], index: 1, kind: input, shape index: {}]
  %s2 = inlined_call_operand.vmem [shape: bf16[17,128], index: 2, kind: input, shape index: {}]
  %s3 = inlined_call_operand.vmem [shape: bf16[6,128], index: 3, kind: input, shape index: {}]
  %s4 = inlined_call_operand.vmem [shape: f32[1,128], index: 4, kind: input, shape index: {}]
  %s5 = inlined_call_operand.vmem [shape: bf16[128,384], index: 5, kind: input, shape index: {}]
  %s6 = inlined_call_operand.vmem [shape: f32[1,384], index: 6, kind: input, shape index: {}]
  %s7 = inlined_call_operand.vmem [shape: bf16[384,1], index: 7, kind: input, shape index: {}]
  %s8 = inlined_call_operand.<no memory space> [shape: f32[1,1], index: 8, kind: input, shape index: {}]
  %s9 = inlined_call_operand.vmem [shape: f32[32,1], index: 9, kind: output, shape index: {}]
  %s10 = sld [smem:[#allocation0]]
  $region69: #{q_critic_forward.1} parent=0
    _
  %s12 = ssub.s32 1, %s10
  %s13 = scalar_select 0, %s12, %s10
  %v14 = vstv %s8
  %15 = vst [vmem:[#allocation2] sm:$0x1] %v14
  loop: start=0, step=1, limit=4
  $region2: #{q_critic_forward.1} parent=0 // loop_pre_header
    _
  $region3: #{q_critic_forward.1} parent=0 // loop_header
    %s17 = sphi 0, %s21
    %p18 = scmp.ge.s32.totalorder %s17, 4
    %s27 = sphi 0, %s29
    %s30 = sphi 0, %s27
    %s31 = sphi 0, %s30
    %s47 = sphi 0, %s31
    %s53 = sphi 0, %s55
    %s56 = sphi 0, %s53
    %s57 = sphi 0, %s56
    %s73 = sphi 0, %s57
    %s77 = sphi 0, %s77
    %s79 = sphi 0, %s77
    %s80 = sphi 0, %s79
    %s94 = sphi 0, %s80
    %s98 = sphi 0, %s98
    %s100 = sphi 0, %s98
    %s101 = sphi 0, %s100
    %s115 = sphi 0, %s101
    %s119 = sphi 0, %s119
    %s121 = sphi 0, %s119
    %s122 = sphi 0, %s121
    %s136 = sphi 0, %s122
    %s140 = sphi 0, %s140
    %s142 = sphi 0, %s140
    %s143 = sphi 0, %s142
    %s157 = sphi 0, %s143
    %s161 = sphi 0, %s161
    %s163 = sphi 0, %s161
    %s164 = sphi 0, %s163
    %s178 = sphi 0, %s164
    %s182 = sphi 0, %s182
    %s184 = sphi 0, %s182
    %s185 = sphi 0, %s184
    %s199 = sphi 0, %s185
    %s203 = sphi 0, %s203
    %s205 = sphi 0, %s203
    %s206 = sphi 0, %s205
    %s220 = sphi 0, %s206
    %s226 = sphi 0, %s228
    %s229 = sphi 0, %s226
    %s230 = sphi 0, %s229
    %s246 = sphi 0, %s230
  $region4: #{q_critic_forward.1} parent=0 // loop_header_branch
    %20 = sbr.rel (%p18) target = $region8
  $region5: #{q_critic_forward.1} parent=0 // loop_body
    %s22 = ssub.s32 %s17, 1
    %s23 = ssub.s32 %s17, 2
    %s24 = sadd.s32 %s17, 1
    %s25 = ssub.s32 %s17, %s24
    %p26 = scmp.eq.s32.totalorder %s25, 0
    %s28 = sadd.s32 %s27, 1
    %s29 = scalar_select %p26, %s27, %s28
    %p32 = pneg %p26
    %p33 = scmp.eq.s32.totalorder %s17, 1
    %p34 = por %p32, %p33
    %p35 = scmp.ne.s32.totalorder %s27, %s30
    %p36 = scmp.eq.s32.totalorder %s17, 0
    %p37 = por %p35, %p36
    %p38 = scmp.ne.s32.totalorder %s27, %s30
    %p39 = scmp.eq.s32.totalorder %s22, 1
    %p40 = por %p38, %p39
    %p41 = scmp.ne.s32.totalorder %s30, %s31
    %p42 = scmp.eq.s32.totalorder %s22, 0
    %p43 = por %p41, %p42
    %p44 = scmp.ne.s32.totalorder %s30, %s31
    %p45 = scmp.eq.s32.totalorder %s23, 1
    %p46 = por %p44, %p45
    %p48 = scmp.ne.s32.totalorder %s31, %s47
    %p49 = scmp.eq.s32.totalorder %s23, 0
    %p50 = por %p48, %p49
    %s51 = ssub.s32 %s17, %s24
    %p52 = scmp.eq.s32.totalorder %s51, 0
    %s54 = sadd.s32 %s53, 1
    %s55 = scalar_select %p52, %s53, %s54
    %p58 = pneg %p52
    %p59 = scmp.eq.s32.totalorder %s17, 1
    %p60 = por %p58, %p59
    %p61 = scmp.ne.s32.totalorder %s53, %s56
    %p62 = scmp.eq.s32.totalorder %s17, 0
    %p63 = por %p61, %p62
    %p64 = scmp.ne.s32.totalorder %s53, %s56
    %p65 = scmp.eq.s32.totalorder %s22, 1
    %p66 = por %p64, %p65
    %p67 = scmp.ne.s32.totalorder %s56, %s57
    %p68 = scmp.eq.s32.totalorder %s22, 0
    %p69 = por %p67, %p68
    %p70 = scmp.ne.s32.totalorder %s56, %s57
    %p71 = scmp.eq.s32.totalorder %s23, 1
    %p72 = por %p70, %p71
    %p74 = scmp.ne.s32.totalorder %s57, %s73
    %p75 = scmp.eq.s32.totalorder %s23, 0
    %p76 = por %p74, %p75
    %s78 = sadd.s32 %s77, 1
    %p81 = scmp.eq.s32.totalorder %s17, 1
    %p82 = scmp.ne.s32.totalorder %s77, %s79
    %p83 = scmp.eq.s32.totalorder %s17, 0
    %p84 = por %p82, %p83
    %p85 = scmp.ne.s32.totalorder %s77, %s79
    %p86 = scmp.eq.s32.totalorder %s22, 1
    %p87 = por %p85, %p86
    %p88 = scmp.ne.s32.totalorder %s79, %s80
    %p89 = scmp.eq.s32.totalorder %s22, 0
    %p90 = por %p88, %p89
    %p91 = scmp.ne.s32.totalorder %s79, %s80
    %p92 = scmp.eq.s32.totalorder %s23, 1
    %p93 = por %p91, %p92
    %p95 = scmp.ne.s32.totalorder %s80, %s94
    %p96 = scmp.eq.s32.totalorder %s23, 0
    %p97 = por %p95, %p96
    %s99 = sadd.s32 %s98, 1
    %p102 = scmp.eq.s32.totalorder %s17, 1
    %p103 = scmp.ne.s32.totalorder %s98, %s100
    %p104 = scmp.eq.s32.totalorder %s17, 0
    %p105 = por %p103, %p104
    %p106 = scmp.ne.s32.totalorder %s98, %s100
    %p107 = scmp.eq.s32.totalorder %s22, 1
    %p108 = por %p106, %p107
    %p109 = scmp.ne.s32.totalorder %s100, %s101
    %p110 = scmp.eq.s32.totalorder %s22, 0
    %p111 = por %p109, %p110
    %p112 = scmp.ne.s32.totalorder %s100, %s101
    %p113 = scmp.eq.s32.totalorder %s23, 1
    %p114 = por %p112, %p113
    %p116 = scmp.ne.s32.totalorder %s101, %s115
    %p117 = scmp.eq.s32.totalorder %s23, 0
    %p118 = por %p116, %p117
    %s120 = sadd.s32 %s119, 1
    %p123 = scmp.eq.s32.totalorder %s17, 1
    %p124 = scmp.ne.s32.totalorder %s119, %s121
    %p125 = scmp.eq.s32.totalorder %s17, 0
    %p126 = por %p124, %p125
    %p127 = scmp.ne.s32.totalorder %s119, %s121
    %p128 = scmp.eq.s32.totalorder %s22, 1
    %p129 = por %p127, %p128
    %p130 = scmp.ne.s32.totalorder %s121, %s122
    %p131 = scmp.eq.s32.totalorder %s22, 0
    %p132 = por %p130, %p131
    %p133 = scmp.ne.s32.totalorder %s121, %s122
    %p134 = scmp.eq.s32.totalorder %s23, 1
    %p135 = por %p133, %p134
    %p137 = scmp.ne.s32.totalorder %s122, %s136
    %p138 = scmp.eq.s32.totalorder %s23, 0
    %p139 = por %p137, %p138
    %s141 = sadd.s32 %s140, 1
    %p144 = scmp.eq.s32.totalorder %s17, 1
    %p145 = scmp.ne.s32.totalorder %s140, %s142
    %p146 = scmp.eq.s32.totalorder %s17, 0
    %p147 = por %p145, %p146
    %p148 = scmp.ne.s32.totalorder %s140, %s142
    %p149 = scmp.eq.s32.totalorder %s22, 1
    %p150 = por %p148, %p149
    %p151 = scmp.ne.s32.totalorder %s142, %s143
    %p152 = scmp.eq.s32.totalorder %s22, 0
    %p153 = por %p151, %p152
    %p154 = scmp.ne.s32.totalorder %s142, %s143
    %p155 = scmp.eq.s32.totalorder %s23, 1
    %p156 = por %p154, %p155
    %p158 = scmp.ne.s32.totalorder %s143, %s157
    %p159 = scmp.eq.s32.totalorder %s23, 0
    %p160 = por %p158, %p159
    %s162 = sadd.s32 %s161, 1
    %p165 = scmp.eq.s32.totalorder %s17, 1
    %p166 = scmp.ne.s32.totalorder %s161, %s163
    %p167 = scmp.eq.s32.totalorder %s17, 0
    %p168 = por %p166, %p167
    %p169 = scmp.ne.s32.totalorder %s161, %s163
    %p170 = scmp.eq.s32.totalorder %s22, 1
    %p171 = por %p169, %p170
    %p172 = scmp.ne.s32.totalorder %s163, %s164
    %p173 = scmp.eq.s32.totalorder %s22, 0
    %p174 = por %p172, %p173
    %p175 = scmp.ne.s32.totalorder %s163, %s164
    %p176 = scmp.eq.s32.totalorder %s23, 1
    %p177 = por %p175, %p176
    %p179 = scmp.ne.s32.totalorder %s164, %s178
    %p180 = scmp.eq.s32.totalorder %s23, 0
    %p181 = por %p179, %p180
    %s183 = sadd.s32 %s182, 1
    %p186 = scmp.eq.s32.totalorder %s17, 1
    %p187 = scmp.ne.s32.totalorder %s182, %s184
    %p188 = scmp.eq.s32.totalorder %s17, 0
    %p189 = por %p187, %p188
    %p190 = scmp.ne.s32.totalorder %s182, %s184
    %p191 = scmp.eq.s32.totalorder %s22, 1
    %p192 = por %p190, %p191
    %p193 = scmp.ne.s32.totalorder %s184, %s185
    %p194 = scmp.eq.s32.totalorder %s22, 0
    %p195 = por %p193, %p194
    %p196 = scmp.ne.s32.totalorder %s184, %s185
    %p197 = scmp.eq.s32.totalorder %s23, 1
    %p198 = por %p196, %p197
    %p200 = scmp.ne.s32.totalorder %s185, %s199
    %p201 = scmp.eq.s32.totalorder %s23, 0
    %p202 = por %p200, %p201
    %s204 = sadd.s32 %s203, 1
    %p207 = scmp.eq.s32.totalorder %s17, 1
    %p208 = scmp.ne.s32.totalorder %s203, %s205
    %p209 = scmp.eq.s32.totalorder %s17, 0
    %p210 = por %p208, %p209
    %p211 = scmp.ne.s32.totalorder %s203, %s205
    %p212 = scmp.eq.s32.totalorder %s22, 1
    %p213 = por %p211, %p212
    %p214 = scmp.ne.s32.totalorder %s205, %s206
    %p215 = scmp.eq.s32.totalorder %s22, 0
    %p216 = por %p214, %p215
    %p217 = scmp.ne.s32.totalorder %s205, %s206
    %p218 = scmp.eq.s32.totalorder %s23, 1
    %p219 = por %p217, %p218
    %p221 = scmp.ne.s32.totalorder %s206, %s220
    %p222 = scmp.eq.s32.totalorder %s23, 0
    %p223 = por %p221, %p222
    %s224 = ssub.s32 %s17, %s24
    %p225 = scmp.eq.s32.totalorder %s224, 0
    %s227 = sadd.s32 %s226, 1
    %s228 = scalar_select %p225, %s226, %s227
    %p231 = pneg %p225
    %p232 = scmp.eq.s32.totalorder %s17, 1
    %p233 = por %p231, %p232
    %p234 = scmp.ne.s32.totalorder %s226, %s229
    %p235 = scmp.eq.s32.totalorder %s17, 0
    %p236 = por %p234, %p235
    %p237 = scmp.ne.s32.totalorder %s226, %s229
    %p238 = scmp.eq.s32.totalorder %s22, 1
    %p239 = por %p237, %p238
    %p240 = scmp.ne.s32.totalorder %s229, %s230
    %p241 = scmp.eq.s32.totalorder %s22, 0
    %p242 = por %p240, %p241
    %p243 = scmp.ne.s32.totalorder %s229, %s230
    %p244 = scmp.eq.s32.totalorder %s23, 1
    %p245 = por %p243, %p244
    %p247 = scmp.ne.s32.totalorder %s230, %s246
    %p248 = scmp.eq.s32.totalorder %s23, 0
    %p249 = por %p247, %p248
    %p250 = scmp.le.s32.totalorder 1, %s17
    %p251 = scmp.lt.s32.totalorder %s17, 3
    %p252 = pnand %p250, %p251
    %p253 = pneg %p252
    // Predicated region
    $region9: #{q_critic_forward.1} parent=5 // pred_check
      _
    $region10: #{q_critic_forward.1} parent=5 // pred_check_branch
      %255 = sbr.rel (%p252) target = $region12
    $region11: #{q_critic_forward.1} parent=5 // pred_region
      %s256 = ssub.s32 %s17, 1
      // Predicated region
      $region13: #{q_critic_forward.1} parent=11 // pred_check
        %p257 = pneg %p90
      $region14: #{q_critic_forward.1} parent=11 // pred_check_branch
        %259 = sbr.rel (%p257) target = $region16
      $region15: #{q_critic_forward.1} parent=11 // pred_region
        _
      $region16: #{q_critic_forward.1} parent=11 // pred_fallthru
        _
      // Predicated region
      $region17: #{q_critic_forward.1} parent=11 // pred_check
        %p260 = pneg %p111
      $region18: #{q_critic_forward.1} parent=11 // pred_check_branch
        %262 = sbr.rel (%p260) target = $region20
      $region19: #{q_critic_forward.1} parent=11 // pred_region
        _
      $region20: #{q_critic_forward.1} parent=11 // pred_fallthru
        _
      // Predicated region
      $region21: #{q_critic_forward.1} parent=11 // pred_check
        %p263 = pneg %p132
      $region22: #{q_critic_forward.1} parent=11 // pred_check_branch
        %265 = sbr.rel (%p263) target = $region24
      $region23: #{q_critic_forward.1} parent=11 // pred_region
        _
      $region24: #{q_critic_forward.1} parent=11 // pred_fallthru
        _
      // Predicated region
      $region25: #{q_critic_forward.1} parent=11 // pred_check
        %p266 = pneg %p153
      $region26: #{q_critic_forward.1} parent=11 // pred_check_branch
        %268 = sbr.rel (%p266) target = $region28
      $region27: #{q_critic_forward.1} parent=11 // pred_region
        _
      $region28: #{q_critic_forward.1} parent=11 // pred_fallthru
        _
      // Predicated region
      $region29: #{q_critic_forward.1} parent=11 // pred_check
        %p269 = pneg %p174
      $region30: #{q_critic_forward.1} parent=11 // pred_check_branch
        %271 = sbr.rel (%p269) target = $region32
      $region31: #{q_critic_forward.1} parent=11 // pred_region
        _
      $region32: #{q_critic_forward.1} parent=11 // pred_fallthru
        _
      // Predicated region
      $region33: #{q_critic_forward.1} parent=11 // pred_check
        %p272 = pneg %p195
      $region34: #{q_critic_forward.1} parent=11 // pred_check_branch
        %274 = sbr.rel (%p272) target = $region36
      $region35: #{q_critic_forward.1} parent=11 // pred_region
        _
      $region36: #{q_critic_forward.1} parent=11 // pred_fallthru
        _
      // Predicated region
      $region37: #{q_critic_forward.1} parent=11 // pred_check
        %p275 = pneg %p216
      $region38: #{q_critic_forward.1} parent=11 // pred_check_branch
        %277 = sbr.rel (%p275) target = $region40
      $region39: #{q_critic_forward.1} parent=11 // pred_region
        _
      $region40: #{q_critic_forward.1} parent=11 // pred_fallthru
        _
    $region12: #{q_critic_forward.1} parent=5 // pred_fallthru
      _
    %p278 = scmp.lt.s32.totalorder %s17, 2
    // Predicated region
    $region41: #{q_critic_forward.1} parent=5 // pred_check
      %p279 = pneg %p278
    $region42: #{q_critic_forward.1} parent=5 // pred_check_branch
      %281 = sbr.rel (%p279) target = $region44
    $region43: #{q_critic_forward.1} parent=5 // pred_region
      // Predicated region
      $region45: #{q_critic_forward.1} parent=43 // pred_check
        %p282 = pneg %p37
      $region46: #{q_critic_forward.1} parent=43 // pred_check_branch
        %284 = sbr.rel (%p282) target = $region48
      $region47: #{q_critic_forward.1} parent=43 // pred_region
        %s285 = smul.u32 2, %s17
        %p286 = scmp.lt.s32.totalorder %s285, 3
        %s287 = scalar_select %p286, %s285, 3
        %s288 = smul.addr %s287, 8
        %s289 = scalar_lea.vmem %s0, %s288
        %s290 = smul.u32 2, %s17
      $region48: #{q_critic_forward.1} parent=43 // pred_fallthru
        _
      // Predicated region
      $region49: #{q_critic_forward.1} parent=43 // pred_check
        %p291 = pneg %p63
      $region50: #{q_critic_forward.1} parent=43 // pred_check_branch
        %293 = sbr.rel (%p291) target = $region52
      $region51: #{q_critic_forward.1} parent=43 // pred_region
        %s294 = smul.u32 2, %s17
        %p295 = scmp.lt.s32.totalorder %s294, 3
        %s296 = scalar_select %p295, %s294, 3
        %s297 = smul.addr %s296, 8
        %s298 = scalar_lea.vmem %s1, %s297
        %s299 = smul.u32 2, %s17
      $region52: #{q_critic_forward.1} parent=43 // pred_fallthru
        _
    $region44: #{q_critic_forward.1} parent=5 // pred_fallthru
      _
    %p300 = scmp.le.s32.totalorder 1, %s17
    %p301 = scmp.lt.s32.totalorder %s17, 3
    %p302 = pnand %p300, %p301
    %p303 = pneg %p302
    // Predicated region
    $region53: #{q_critic_forward.1} parent=5 // pred_check
      _
    $region54: #{q_critic_forward.1} parent=5 // pred_check_branch
      %305 = sbr.rel (%p302) target = $region56
    $region55: #{q_critic_forward.1} parent=5 // pred_region
      %s306 = ssub.s32 %s17, 1
      %s307 = smul.u32 2, %s22
      %p308 = scmp.lt.s32.totalorder %s307, 3
      %s309 = scalar_select %p308, %s307, 3
      %s310 = smul.addr %s309, 8
      %s311 = scalar_lea.vmem %s0, %s310
      %p312 = pneg %p43
      %p313 = pneg %p40
      %s314 = smul.u32 2, %s22
      %p315 = scmp.lt.s32.totalorder %s314, 3
      %s316 = scalar_select %p315, %s314, 3
      %s317 = smul.addr %s316, 8
      %s318 = scalar_lea.vmem %s1, %s317
      %p319 = pneg %p69
      %p320 = pneg %p66
      %p321 = pneg %p90
      %p322 = pneg %p87
      %p323 = pneg %p111
      %p324 = pneg %p108
      %p325 = pneg %p132
      %p326 = pneg %p129
      %p327 = pneg %p153
      %p328 = pneg %p150
      %p329 = pneg %p174
      %p330 = pneg %p171
      %p331 = pneg %p195
      %p332 = pneg %p192
      %p333 = pneg %p216
      %p334 = pneg %p213
      %p335 = pneg %p242
      %p336 = pneg %p239
      %s337 = smul.u32 2, %s22
      %p338 = scmp.lt.s32.totalorder %s337, 3
      %s339 = scalar_select %p338, %s337, 3
      %s340 = smul.addr %s339, 8
      %s341 = scalar_lea.vmem %s9, %s340
      %s342 = smul.u32 2, %s22
      %p343 = scmp.lt.s32.totalorder %s342, 3
      %s344 = scalar_select %p343, %s342, 3
      %s345 = smul.addr %s344, 8
      %s346 = scalar_lea.vmem %s0, %s345
      %s347 = smul.u32 2, %s22
      %s348 = smul.u32 2, %s22
      %p349 = scmp.lt.s32.totalorder %s348, 3
      %s350 = scalar_select %p349, %s348, 3
      %s351 = smul.addr %s350, 8
      %s352 = scalar_lea.vmem %s1, %s351
      %s353 = smul.u32 2, %s22
      %s354 = smul.u32 2, %s22
      %p355 = scmp.lt.s32.totalorder %s354, 3
      %s356 = scalar_select %p355, %s354, 3
      %s357 = smul.addr %s356, 8
      %s358 = scalar_lea.vmem %s9, %s357
      %s359 = smul.u32 2, %s22
      %v361 = vld [vmem:[%s346] sm:$0xff]
      %v362 = vld [vmem:[%s346 + $0x8] sm:$0xff]
      %v363 = vpack.c.bf16 %v362, %v361
      %v364 = vld [vmem:[%s352] sm:$0xff]
      %v365 = vld [vmem:[%s352 + $0x8] sm:$0xff]
      %v366 = vpack.c.bf16 %v365, %v364
      %v367 = vld [vmem:[%s2] sm:$0xf]
      %v368 = vld [vmem:[%s2 + $0x4] sm:$0xf]
      %v369 = vld [vmem:[%s2 + $0x8] sm:$0x1]
      %v370 = vld [vmem:[%s3] sm:$0x7]
      %vm371 = vcmask 48128
      %v373 = vsel %vm371, %v366, 0
      %vm375 = vcmask 1042432
      %v377 = vsel %vm375, %v370, 0
      %379 = vmatprep.subr.bf16.mxu0 0
      %380 = vmatpush1.bf16.msra.mxu0 %v377
      %381 = vmatprep.subr.bf16.mxu0 0
      %382 = vmatpush1.bf16.msra.mxu0 0
      %383 = vmatprep.subr.bf16.mxu0 0
      %384 = vmatpush1.bf16.msra.mxu0 0
      %385 = vmatprep.subr.bf16.mxu0 0
      %386 = vmatpush1.bf16.msra.mxu0 0
      %387 = vmatprep.subr.bf16.mxu0 0
      %388 = vmatpush1.bf16.msra.mxu0 0
      %389 = vmatprep.subr.bf16.mxu0 0
      %390 = vmatpush1.bf16.msra.mxu0 0
      %391 = vmatprep.subr.bf16.mxu0 0
      %392 = vmatpush1.bf16.msra.mxu0 0
      %393 = vmatprep.subr.bf16.mxu0 0
      %394 = vmatpush1.bf16.msra.mxu0 0
      %395 = vmatprep.subr.bf16.mxu0 0
      %396 = vmatpush1.bf16.msra.mxu0 0
      %397 = vmatprep.subr.bf16.mxu0 0
      %398 = vmatpush1.bf16.msra.mxu0 0
      %399 = vmatprep.subr.bf16.mxu0 0
      %400 = vmatpush1.bf16.msra.mxu0 0
      %401 = vmatprep.subr.bf16.mxu0 0
      %402 = vmatpush1.bf16.msra.mxu0 0
      %403 = vmatprep.subr.bf16.mxu0 0
      %404 = vmatpush1.bf16.msra.mxu0 0
      %405 = vmatprep.subr.bf16.mxu0 0
      %406 = vmatpush1.bf16.msra.mxu0 0
      %407 = vmatprep.subr.bf16.mxu0 0
      %408 = vmatpush1.bf16.msra.mxu0 0
      %409 = vmatprep.subr.bf16.mxu0 0
      %410 = vmatpush1.bf16.msra.mxu0 0
      %411 = vmatprep.mubr.bf16.mxu0 0
      %412 = vmatmul.mubr.bf16.gmra.mrb[0].mxu0 %v373
      %v413 = vpop.f32.mrb[0].mxu0
      %v414 = vadd.f32 0.0, %v413
      %v415 = vpop.f32.mrb[0].mxu0
      %v416 = vpop.f32.mrb[0].mxu0
      %v417 = vadd.f32 0.0, %v416
      %v418 = vpop.f32.mrb[0].mxu0
      %419 = vdwg.mxu0
      %v423 = vunpack.c.l.b16 %v367
      %v424 = vunpack.c.l.b16 %v368
      %v425 = vunpack.c.l.b16 %v369
      %v426 = vpack.c.b16 %v424, %v423
      %v427 = vpack.c.b16 %v425, %v425
      %vm429 = vcmask 138240
      %v431 = vsel %vm429, %v363, 0
      %vm433 = vcmask 1040384
      %v434 = vsel 0, 4294967295, 65535
      %v435 = vsel %vm433, %v434, 0
      %v437 = vand.u32 %v427, %v435
      %439 = vmatprep.subr.bf16.mxu0 0
      %440 = vmatpush1.bf16.msra.mxu0 %v426
      %441 = vmatprep.subr.bf16.mxu0 0
      %442 = vmatpush1.bf16.msra.mxu0 %v437
      %443 = vmatprep.subr.bf16.mxu0 0
      %444 = vmatpush1.bf16.msra.mxu0 0
      %445 = vmatprep.subr.bf16.mxu0 0
      %446 = vmatpush1.bf16.msra.mxu0 0
      %447 = vmatprep.subr.bf16.mxu0 0
      %448 = vmatpush1.bf16.msra.mxu0 0
      %449 = vmatprep.subr.bf16.mxu0 0
      %450 = vmatpush1.bf16.msra.mxu0 0
      %451 = vmatprep.subr.bf16.mxu0 0
      %452 = vmatpush1.bf16.msra.mxu0 0
      %453 = vmatprep.subr.bf16.mxu0 0
      %454 = vmatpush1.bf16.msra.mxu0 0
      %455 = vmatprep.subr.bf16.mxu0 0
      %456 = vmatpush1.bf16.msra.mxu0 0
      %457 = vmatprep.subr.bf16.mxu0 0
      %458 = vmatpush1.bf16.msra.mxu0 0
      %459 = vmatprep.subr.bf16.mxu0 0
      %460 = vmatpush1.bf16.msra.mxu0 0
      %461 = vmatprep.subr.bf16.mxu0 0
      %462 = vmatpush1.bf16.msra.mxu0 0
      %463 = vmatprep.subr.bf16.mxu0 0
      %464 = vmatpush1.bf16.msra.mxu0 0
      %465 = vmatprep.subr.bf16.mxu0 0
      %466 = vmatpush1.bf16.msra.mxu0 0
      %467 = vmatprep.subr.bf16.mxu0 0
      %468 = vmatpush1.bf16.msra.mxu0 0
      %469 = vmatprep.subr.bf16.mxu0 0
      %470 = vmatpush1.bf16.msra.mxu0 0
      %471 = vmatprep.mubr.bf16.mxu0 0
      %472 = vmatmul.mubr.bf16.gmra.mrb[0].mxu0 %v431
      %v473 = vpop.f32.mrb[0].mxu0
      %v474 = vadd.f32 %v414, %v473
      %v475 = vpop.f32.mrb[0].mxu0
      %v476 = vpop.f32.mrb[0].mxu0
      %v477 = vadd.f32 %v417, %v476
      %v478 = vpop.f32.mrb[0].mxu0
      %479 = vdwg.mxu0
      %v480 = vld [vmem:[%s4] sm:$0x1]
      %v482 = vlaneseq
      %v483 = vshrl.u32 %v482, 7
      %v484 = vsub.s32 0, %v483
      %v485 = vrot.slane %v480, %v484
      %v487 = vadd.f32 %v474, %v485
      %v488 = vadd.f32 %v477, %v485
      %v489 = vmax.f32 %v487, 0.0
      %v490 = vmax.f32 %v488, 0.0
      %v491 = vpack.c.bf16 %v490, %v489
      %v492 = vld [vmem:[%s5] sm:$0xff]
      %v493 = vld [vmem:[%s5 + $0x8] sm:$0xf]
      %v494 = vld [vmem:[%s5 + $0xc] sm:$0xff]
      %v495 = vld [vmem:[%s5 + $0x14] sm:$0xf]
      %v496 = vld [vmem:[%s5 + $0x18] sm:$0xff]
      %v497 = vld [vmem:[%s5 + $0x20] sm:$0xf]
      %v498 = vld [vmem:[%s5 + $0x24] sm:$0xff]
      %v499 = vld [vmem:[%s5 + $0x2c] sm:$0xf]
      %v500 = vld [vmem:[%s5 + $0x30] sm:$0xff]
      %v501 = vld [vmem:[%s5 + $0x38] sm:$0xf]
      %v502 = vld [vmem:[%s5 + $0x3c] sm:$0xff]
      %v503 = vld [vmem:[%s5 + $0x44] sm:$0xf]
      %v504 = vld [vmem:[%s5 + $0x48] sm:$0xff]
      %v505 = vld [vmem:[%s5 + $0x50] sm:$0xf]
      %v506 = vld [vmem:[%s5 + $0x54] sm:$0xff]
      %v507 = vld [vmem:[%s5 + $0x5c] sm:$0xf]
      %v508 = vld [vmem:[%s5 + $0x60] sm:$0xff]
      %v509 = vld [vmem:[%s5 + $0x68] sm:$0xf]
      %v510 = vld [vmem:[%s5 + $0x6c] sm:$0xff]
      %v511 = vld [vmem:[%s5 + $0x74] sm:$0xf]
      %v512 = vld [vmem:[%s5 + $0x78] sm:$0xff]
      %v513 = vld [vmem:[%s5 + $0x80] sm:$0xf]
      %v514 = vld [vmem:[%s5 + $0x84] sm:$0xff]
      %v515 = vld [vmem:[%s5 + $0x8c] sm:$0xf]
      %v516 = vld [vmem:[%s5 + $0x90] sm:$0xff]
      %v517 = vld [vmem:[%s5 + $0x98] sm:$0xf]
      %v518 = vld [vmem:[%s5 + $0x9c] sm:$0xff]
      %v519 = vld [vmem:[%s5 + $0xa4] sm:$0xf]
      %v520 = vld [vmem:[%s5 + $0xa8] sm:$0xff]
      %v521 = vld [vmem:[%s5 + $0xb0] sm:$0xf]
      %v522 = vld [vmem:[%s5 + $0xb4] sm:$0xff]
      %v523 = vld [vmem:[%s5 + $0xbc] sm:$0xf]
      %v524 = vld [vmem:[%s6] sm:$0x7]
      %v526 = vlaneseq
      %v527 = vshrl.u32 %v526, 7
      %v528 = vsub.s32 0, %v527
      %v529 = vrot.slane %v524, %v528
      %v530 = vlaneseq
      %v531 = vshrl.u32 %v530, 7
      %v532 = vsub.s32 1, %v531
      %v533 = vrot.slane %v524, %v532
      %v534 = vlaneseq
      %v535 = vshrl.u32 %v534, 7
      %v536 = vsub.s32 2, %v535
      %v537 = vrot.slane %v524, %v536
      %v573 = vunpack.c.l.b16 %v492
      %v574 = vunpack.c.h.b16 %v492
      %v575 = vunpack.c.l.b16 %v493
      %v576 = vunpack.c.l.b16 %v494
      %v577 = vunpack.c.h.b16 %v494
      %v578 = vunpack.c.l.b16 %v495
      %v579 = vunpack.c.l.b16 %v496
      %v580 = vunpack.c.h.b16 %v496
      %v581 = vunpack.c.l.b16 %v497
      %v582 = vunpack.c.l.b16 %v498
      %v583 = vunpack.c.h.b16 %v498
      %v584 = vunpack.c.l.b16 %v499
      %v585 = vunpack.c.l.b16 %v500
      %v586 = vunpack.c.h.b16 %v500
      %v587 = vunpack.c.l.b16 %v501
      %v588 = vunpack.c.l.b16 %v502
      %v589 = vunpack.c.h.b16 %v502
      %v590 = vunpack.c.l.b16 %v503
      %v591 = vunpack.c.l.b16 %v504
      %v592 = vunpack.c.h.b16 %v504
      %v593 = vunpack.c.l.b16 %v505
      %v594 = vunpack.c.l.b16 %v506
      %v595 = vunpack.c.h.b16 %v506
      %v596 = vunpack.c.l.b16 %v507
      %v597 = vunpack.c.l.b16 %v508
      %v598 = vunpack.c.h.b16 %v508
      %v599 = vunpack.c.l.b16 %v509
      %v600 = vunpack.c.l.b16 %v510
      %v601 = vunpack.c.h.b16 %v510
      %v602 = vunpack.c.l.b16 %v511
      %v603 = vunpack.c.l.b16 %v512
      %v604 = vunpack.c.h.b16 %v512
      %v605 = vunpack.c.l.b16 %v513
      %v606 = vunpack.c.l.b16 %v514
      %v607 = vunpack.c.h.b16 %v514
      %v608 = vunpack.c.l.b16 %v515
      %v609 = vunpack.c.l.b16 %v516
      %v610 = vunpack.c.h.b16 %v516
      %v611 = vunpack.c.l.b16 %v517
      %v612 = vunpack.c.l.b16 %v518
      %v613 = vunpack.c.h.b16 %v518
      %v614 = vunpack.c.l.b16 %v519
      %v615 = vunpack.c.l.b16 %v520
      %v616 = vunpack.c.h.b16 %v520
      %v617 = vunpack.c.l.b16 %v521
      %v618 = vunpack.c.l.b16 %v522
      %v619 = vunpack.c.h.b16 %v522
      %v620 = vunpack.c.l.b16 %v523
      %v621 = vpack.c.b16 %v576, %v573
      %v622 = vpack.c.b16 %v577, %v574
      %v623 = vpack.c.b16 %v578, %v575
      %v624 = vpack.c.b16 %v582, %v579
      %v625 = vpack.c.b16 %v583, %v580
      %v626 = vpack.c.b16 %v584, %v581
      %v627 = vpack.c.b16 %v588, %v585
      %v628 = vpack.c.b16 %v589, %v586
      %v629 = vpack.c.b16 %v590, %v587
      %v630 = vpack.c.b16 %v594, %v591
      %v631 = vpack.c.b16 %v595, %v592
      %v632 = vpack.c.b16 %v596, %v593
      %v633 = vpack.c.b16 %v600, %v597
      %v634 = vpack.c.b16 %v601, %v598
      %v635 = vpack.c.b16 %v602, %v599
      %v636 = vpack.c.b16 %v606, %v603
      %v637 = vpack.c.b16 %v607, %v604
      %v638 = vpack.c.b16 %v608, %v605
      %v639 = vpack.c.b16 %v612, %v609
      %v640 = vpack.c.b16 %v613, %v610
      %v641 = vpack.c.b16 %v614, %v611
      %v642 = vpack.c.b16 %v618, %v615
      %v643 = vpack.c.b16 %v619, %v616
      %v644 = vpack.c.b16 %v620, %v617
      %669 = vmatprep.subr.bf16.mxu0 %v622
      %670 = vmatpush1.bf16.msra.mxu0 %v621
      %671 = vmatprep.subr.bf16.mxu0 %v625
      %672 = vmatpush1.bf16.msra.mxu0 %v624
      %673 = vmatprep.subr.bf16.mxu0 %v628
      %674 = vmatpush1.bf16.msra.mxu0 %v627
      %675 = vmatprep.subr.bf16.mxu0 %v631
      %676 = vmatpush1.bf16.msra.mxu0 %v630
      %677 = vmatprep.subr.bf16.mxu0 %v634
      %678 = vmatpush1.bf16.msra.mxu0 %v633
      %679 = vmatprep.subr.bf16.mxu0 %v637
      %680 = vmatpush1.bf16.msra.mxu0 %v636
      %681 = vmatprep.subr.bf16.mxu0 %v640
      %682 = vmatpush1.bf16.msra.mxu0 %v639
      %683 = vmatprep.subr.bf16.mxu0 %v643
      %684 = vmatpush1.bf16.msra.mxu0 %v642
      %685 = vmatprep.subr.bf16.mxu0 0
      %686 = vmatpush1.bf16.msra.mxu0 0
      %687 = vmatprep.subr.bf16.mxu0 0
      %688 = vmatpush1.bf16.msra.mxu0 0
      %689 = vmatprep.subr.bf16.mxu0 0
      %690 = vmatpush1.bf16.msra.mxu0 0
      %691 = vmatprep.subr.bf16.mxu0 0
      %692 = vmatpush1.bf16.msra.mxu0 0
      %693 = vmatprep.subr.bf16.mxu0 0
      %694 = vmatpush1.bf16.msra.mxu0 0
      %695 = vmatprep.subr.bf16.mxu0 0
      %696 = vmatpush1.bf16.msra.mxu0 0
      %697 = vmatprep.subr.bf16.mxu0 0
      %698 = vmatpush1.bf16.msra.mxu0 0
      %699 = vmatprep.subr.bf16.mxu0 0
      %700 = vmatpush1.bf16.msra.mxu0 0
      %701 = vmatprep.mubr.bf16.mxu0 0
      %702 = vmatmul.mubr.bf16.gmra.mrb[0].mxu0 %v491
      %v703 = vpop.f32.mrb[0].mxu0
      %v704 = vadd.f32 %v529, %v703
      %v705 = vpop.f32.mrb[0].mxu0
      %v706 = vadd.f32 %v533, %v705
      %v707 = vpop.f32.mrb[0].mxu0
      %v708 = vadd.f32 %v529, %v707
      %v709 = vpop.f32.mrb[0].mxu0
      %v710 = vadd.f32 %v533, %v709
      %711 = vdwg.mxu0
      %712 = vmatprep.subr.bf16.mxu0 0
      %713 = vmatpush1.bf16.msra.mxu0 %v623
      %714 = vmatprep.subr.bf16.mxu0 0
      %715 = vmatpush1.bf16.msra.mxu0 %v626
      %716 = vmatprep.subr.bf16.mxu0 0
      %717 = vmatpush1.bf16.msra.mxu0 %v629
      %718 = vmatprep.subr.bf16.mxu0 0
      %719 = vmatpush1.bf16.msra.mxu0 %v632
      %720 = vmatprep.subr.bf16.mxu0 0
      %721 = vmatpush1.bf16.msra.mxu0 %v635
      %722 = vmatprep.subr.bf16.mxu0 0
      %723 = vmatpush1.bf16.msra.mxu0 %v638
      %724 = vmatprep.subr.bf16.mxu0 0
      %725 = vmatpush1.bf16.msra.mxu0 %v641
      %726 = vmatprep.subr.bf16.mxu0 0
      %727 = vmatpush1.bf16.msra.mxu0 %v644
      %728 = vmatprep.subr.bf16.mxu0 0
      %729 = vmatpush1.bf16.msra.mxu0 0
      %730 = vmatprep.subr.bf16.mxu0 0
      %731 = vmatpush1.bf16.msra.mxu0 0
      %732 = vmatprep.subr.bf16.mxu0 0
      %733 = vmatpush1.bf16.msra.mxu0 0
      %734 = vmatprep.subr.bf16.mxu0 0
      %735 = vmatpush1.bf16.msra.mxu0 0
      %736 = vmatprep.subr.bf16.mxu0 0
      %737 = vmatpush1.bf16.msra.mxu0 0
      %738 = vmatprep.subr.bf16.mxu0 0
      %739 = vmatpush1.bf16.msra.mxu0 0
      %740 = vmatprep.subr.bf16.mxu0 0
      %741 = vmatpush1.bf16.msra.mxu0 0
      %742 = vmatprep.subr.bf16.mxu0 0
      %743 = vmatpush1.bf16.msra.mxu0 0
      %744 = vmatprep.mubr.bf16.mxu0 0
      %745 = vmatmul.mubr.bf16.gmra.mrb[0].mxu0 %v491
      %v746 = vpop.f32.mrb[0].mxu0
      %v747 = vadd.f32 %v537, %v746
      %v748 = vpop.f32.mrb[0].mxu0
      %v749 = vpop.f32.mrb[0].mxu0
      %v750 = vadd.f32 %v537, %v749
      %v751 = vpop.f32.mrb[0].mxu0
      %752 = vdwg.mxu0
      %v753 = vmax.f32 %v704, 0.0
      %v754 = vmax.f32 %v706, 0.0
      %v755 = vmax.f32 %v747, 0.0
      %v756 = vmax.f32 %v708, 0.0
      %v757 = vmax.f32 %v710, 0.0
      %v758 = vmax.f32 %v750, 0.0
      %v759 = vpack.c.bf16 %v756, %v753
      %v760 = vpack.c.bf16 %v757, %v754
      %v761 = vpack.c.bf16 %v758, %v755
      %v762 = vld [vmem:[%s7] sm:$0xf]
      %v763 = vld [vmem:[%s7 + $0x4] sm:$0xf]
      %v764 = vld [vmem:[%s7 + $0x8] sm:$0xf]
      %v765 = vld [vmem:[%s7 + $0xc] sm:$0xf]
      %v766 = vld [vmem:[%s7 + $0x10] sm:$0xf]
      %v767 = vld [vmem:[%s7 + $0x14] sm:$0xf]
      %v768 = vld [vmem:[%s7 + $0x18] sm:$0xf]
      %v769 = vld [vmem:[%s7 + $0x1c] sm:$0xf]
      %v770 = vld [vmem:[%s7 + $0x20] sm:$0xf]
      %v771 = vld [vmem:[%s7 + $0x24] sm:$0xf]
      %v772 = vld [vmem:[%s7 + $0x28] sm:$0xf]
      %v773 = vld [vmem:[%s7 + $0x2c] sm:$0xf]
      %v774 = vld [vmem:[%s7 + $0x30] sm:$0xf]
      %v775 = vld [vmem:[%s7 + $0x34] sm:$0xf]
      %v776 = vld [vmem:[%s7 + $0x38] sm:$0xf]
      %v777 = vld [vmem:[%s7 + $0x3c] sm:$0xf]
      %v778 = vld [vmem:[%s7 + $0x40] sm:$0xf]
      %v779 = vld [vmem:[%s7 + $0x44] sm:$0xf]
      %v780 = vld [vmem:[%s7 + $0x48] sm:$0xf]
      %v781 = vld [vmem:[%s7 + $0x4c] sm:$0xf]
      %v782 = vld [vmem:[%s7 + $0x50] sm:$0xf]
      %v783 = vld [vmem:[%s7 + $0x54] sm:$0xf]
      %v784 = vld [vmem:[%s7 + $0x58] sm:$0xf]
      %v785 = vld [vmem:[%s7 + $0x5c] sm:$0xf]
      %v786 = vld [vmem:[%s7 + $0x60] sm:$0xf]
      %v787 = vld [vmem:[%s7 + $0x64] sm:$0xf]
      %v788 = vld [vmem:[%s7 + $0x68] sm:$0xf]
      %v789 = vld [vmem:[%s7 + $0x6c] sm:$0xf]
      %v790 = vld [vmem:[%s7 + $0x70] sm:$0xf]
      %v791 = vld [vmem:[%s7 + $0x74] sm:$0xf]
      %v792 = vld [vmem:[%s7 + $0x78] sm:$0xf]
      %v793 = vld [vmem:[%s7 + $0x7c] sm:$0xf]
      %v794 = vld [vmem:[%s7 + $0x80] sm:$0xf]
      %v795 = vld [vmem:[%s7 + $0x84] sm:$0xf]
      %v796 = vld [vmem:[%s7 + $0x88] sm:$0xf]
      %v797 = vld [vmem:[%s7 + $0x8c] sm:$0xf]
      %v798 = vld [vmem:[%s7 + $0x90] sm:$0xf]
      %v799 = vld [vmem:[%s7 + $0x94] sm:$0xf]
      %v800 = vld [vmem:[%s7 + $0x98] sm:$0xf]
      %v801 = vld [vmem:[%s7 + $0x9c] sm:$0xf]
      %v802 = vld [vmem:[%s7 + $0xa0] sm:$0xf]
      %v803 = vld [vmem:[%s7 + $0xa4] sm:$0xf]
      %v804 = vld [vmem:[%s7 + $0xa8] sm:$0xf]
      %v805 = vld [vmem:[%s7 + $0xac] sm:$0xf]
      %v806 = vld [vmem:[%s7 + $0xb0] sm:$0xf]
      %v807 = vld [vmem:[%s7 + $0xb4] sm:$0xf]
      %v808 = vld [vmem:[%s7 + $0xb8] sm:$0xf]
      %v809 = vld [vmem:[%s7 + $0xbc] sm:$0xf]
      %v810 = vld [vmem:[#allocation2] sm:$0x1]
      %v812 = vlaneseq
      %v813 = vshrl.u32 %v812, 7
      %v814 = vsub.s32 0, %v813
      %v815 = vrot.slane %v810, %v814
      %v865 = vunpack.c.l.b16 %v762
      %v866 = vunpack.c.l.b16 %v763
      %v867 = vunpack.c.l.b16 %v764
      %v868 = vunpack.c.l.b16 %v765
      %v869 = vunpack.c.l.b16 %v766
      %v870 = vunpack.c.l.b16 %v767
      %v871 = vunpack.c.l.b16 %v768
      %v872 = vunpack.c.l.b16 %v769
      %v873 = vunpack.c.l.b16 %v770
      %v874 = vunpack.c.l.b16 %v771
      %v875 = vunpack.c.l.b16 %v772
      %v876 = vunpack.c.l.b16 %v773
      %v877 = vunpack.c.l.b16 %v774
      %v878 = vunpack.c.l.b16 %v775
      %v879 = vunpack.c.l.b16 %v776
      %v880 = vunpack.c.l.b16 %v777
      %v881 = vunpack.c.l.b16 %v778
      %v882 = vunpack.c.l.b16 %v779
      %v883 = vunpack.c.l.b16 %v780
      %v884 = vunpack.c.l.b16 %v781
      %v885 = vunpack.c.l.b16 %v782
      %v886 = vunpack.c.l.b16 %v783
      %v887 = vunpack.c.l.b16 %v784
      %v888 = vunpack.c.l.b16 %v785
      %v889 = vunpack.c.l.b16 %v786
      %v890 = vunpack.c.l.b16 %v787
      %v891 = vunpack.c.l.b16 %v788
      %v892 = vunpack.c.l.b16 %v789
      %v893 = vunpack.c.l.b16 %v790
      %v894 = vunpack.c.l.b16 %v791
      %v895 = vunpack.c.l.b16 %v792
      %v896 = vunpack.c.l.b16 %v793
      %v897 = vunpack.c.l.b16 %v794
      %v898 = vunpack.c.l.b16 %v795
      %v899 = vunpack.c.l.b16 %v796
      %v900 = vunpack.c.l.b16 %v797
      %v901 = vunpack.c.l.b16 %v798
      %v902 = vunpack.c.l.b16 %v799
      %v903 = vunpack.c.l.b16 %v800
      %v904 = vunpack.c.l.b16 %v801
      %v905 = vunpack.c.l.b16 %v802
      %v906 = vunpack.c.l.b16 %v803
      %v907 = vunpack.c.l.b16 %v804
      %v908 = vunpack.c.l.b16 %v805
      %v909 = vunpack.c.l.b16 %v806
      %v910 = vunpack.c.l.b16 %v807
      %v911 = vunpack.c.l.b16 %v808
      %v912 = vunpack.c.l.b16 %v809
      %v913 = vpack.c.b16 %v866, %v865
      %v914 = vpack.c.b16 %v868, %v867
      %v915 = vpack.c.b16 %v870, %v869
      %v916 = vpack.c.b16 %v872, %v871
      %v917 = vpack.c.b16 %v874, %v873
      %v918 = vpack.c.b16 %v876, %v875
      %v919 = vpack.c.b16 %v878, %v877
      %v920 = vpack.c.b16 %v880, %v879
      %v921 = vpack.c.b16 %v882, %v881
      %v922 = vpack.c.b16 %v884, %v883
      %v923 = vpack.c.b16 %v886, %v885
      %v924 = vpack.c.b16 %v888, %v887
      %v925 = vpack.c.b16 %v890, %v889
      %v926 = vpack.c.b16 %v892, %v891
      %v927 = vpack.c.b16 %v894, %v893
      %v928 = vpack.c.b16 %v896, %v895
      %v929 = vpack.c.b16 %v898, %v897
      %v930 = vpack.c.b16 %v900, %v899
      %v931 = vpack.c.b16 %v902, %v901
      %v932 = vpack.c.b16 %v904, %v903
      %v933 = vpack.c.b16 %v906, %v905
      %v934 = vpack.c.b16 %v908, %v907
      %v935 = vpack.c.b16 %v910, %v909
      %v936 = vpack.c.b16 %v912, %v911
      %961 = vmatprep.subr.bf16.mxu0 0
      %962 = vmatpush1.bf16.msra.mxu0 %v913
      %963 = vmatprep.subr.bf16.mxu0 0
      %964 = vmatpush1.bf16.msra.mxu0 %v914
      %965 = vmatprep.subr.bf16.mxu0 0
      %966 = vmatpush1.bf16.msra.mxu0 %v915
      %967 = vmatprep.subr.bf16.mxu0 0
      %968 = vmatpush1.bf16.msra.mxu0 %v916
      %969 = vmatprep.subr.bf16.mxu0 0
      %970 = vmatpush1.bf16.msra.mxu0 %v917
      %971 = vmatprep.subr.bf16.mxu0 0
      %972 = vmatpush1.bf16.msra.mxu0 %v918
      %973 = vmatprep.subr.bf16.mxu0 0
      %974 = vmatpush1.bf16.msra.mxu0 %v919
      %975 = vmatprep.subr.bf16.mxu0 0
      %976 = vmatpush1.bf16.msra.mxu0 %v920
      %977 = vmatprep.subr.bf16.mxu0 0
      %978 = vmatpush1.bf16.msra.mxu0 %v921
      %979 = vmatprep.subr.bf16.mxu0 0
      %980 = vmatpush1.bf16.msra.mxu0 %v922
      %981 = vmatprep.subr.bf16.mxu0 0
      %982 = vmatpush1.bf16.msra.mxu0 %v923
      %983 = vmatprep.subr.bf16.mxu0 0
      %984 = vmatpush1.bf16.msra.mxu0 %v924
      %985 = vmatprep.subr.bf16.mxu0 0
      %986 = vmatpush1.bf16.msra.mxu0 %v925
      %987 = vmatprep.subr.bf16.mxu0 0
      %988 = vmatpush1.bf16.msra.mxu0 %v926
      %989 = vmatprep.subr.bf16.mxu0 0
      %990 = vmatpush1.bf16.msra.mxu0 %v927
      %991 = vmatprep.subr.bf16.mxu0 0
      %992 = vmatpush1.bf16.msra.mxu0 %v928
      %993 = vmatprep.mubr.bf16.mxu0 %v760
      %994 = vmatmul.mubr.bf16.gmra.mrb[0].mxu0 %v759
      %v995 = vpop.f32.mrb[0].mxu0
      %v996 = vadd.f32 %v815, %v995
      %v997 = vpop.f32.mrb[0].mxu0
      %v998 = vpop.f32.mrb[0].mxu0
      %v999 = vadd.f32 %v815, %v998
      %v1000 = vpop.f32.mrb[0].mxu0
      %1001 = vdwg.mxu0
      %1002 = vmatprep.subr.bf16.mxu0 0
      %1003 = vmatpush1.bf16.msra.mxu0 %v929
      %1004 = vmatprep.subr.bf16.mxu0 0
      %1005 = vmatpush1.bf16.msra.mxu0 %v930
      %1006 = vmatprep.subr.bf16.mxu0 0
      %1007 = vmatpush1.bf16.msra.mxu0 %v931
      %1008 = vmatprep.subr.bf16.mxu0 0
      %1009 = vmatpush1.bf16.msra.mxu0 %v932
      %1010 = vmatprep.subr.bf16.mxu0 0
      %1011 = vmatpush1.bf16.msra.mxu0 %v933
      %1012 = vmatprep.subr.bf16.mxu0 0
      %1013 = vmatpush1.bf16.msra.mxu0 %v934
      %1014 = vmatprep.subr.bf16.mxu0 0
      %1015 = vmatpush1.bf16.msra.mxu0 %v935
      %1016 = vmatprep.subr.bf16.mxu0 0
      %1017 = vmatpush1.bf16.msra.mxu0 %v936
      %1018 = vmatprep.subr.bf16.mxu0 0
      %1019 = vmatpush1.bf16.msra.mxu0 0
      %1020 = vmatprep.subr.bf16.mxu0 0
      %1021 = vmatpush1.bf16.msra.mxu0 0
      %1022 = vmatprep.subr.bf16.mxu0 0
      %1023 = vmatpush1.bf16.msra.mxu0 0
      %1024 = vmatprep.subr.bf16.mxu0 0
      %1025 = vmatpush1.bf16.msra.mxu0 0
      %1026 = vmatprep.subr.bf16.mxu0 0
      %1027 = vmatpush1.bf16.msra.mxu0 0
      %1028 = vmatprep.subr.bf16.mxu0 0
      %1029 = vmatpush1.bf16.msra.mxu0 0
      %1030 = vmatprep.subr.bf16.mxu0 0
      %1031 = vmatpush1.bf16.msra.mxu0 0
      %1032 = vmatprep.subr.bf16.mxu0 0
      %1033 = vmatpush1.bf16.msra.mxu0 0
      %1034 = vmatprep.mubr.bf16.mxu0 0
      %1035 = vmatmul.mubr.bf16.gmra.mrb[0].mxu0 %v761
      %v1036 = vpop.f32.mrb[0].mxu0
      %v1037 = vadd.f32 %v996, %v1036
      %v1038 = vpop.f32.mrb[0].mxu0
      %v1039 = vpop.f32.mrb[0].mxu0
      %v1040 = vadd.f32 %v999, %v1039
      %v1041 = vpop.f32.mrb[0].mxu0
      %1042 = vdwg.mxu0
      %vm1043 = vcmask 7168
      %1044 = vst.msk [vmem:[%s358] sm:$0xff] %vm1043, %v1037
      %1045 = vst.msk [vmem:[%s358 + $0x8] sm:$0xff] %vm1043, %v1040
      %s1046 = smul.u32 2, %s22
      %p1047 = scmp.lt.s32.totalorder %s1046, 3
      %s1048 = scalar_select %p1047, %s1046, 3
      %s1049 = smul.addr %s1048, 8
      %s1050 = scalar_lea.vmem %s9, %s1049
      // Predicated region
      $region57: #{q_critic_forward.1} parent=55 // pred_check
        %p1051 = pneg %p239
      $region58: #{q_critic_forward.1} parent=55 // pred_check_branch
        %1053 = sbr.rel (%p1051) target = $region60
      $region59: #{q_critic_forward.1} parent=55 // pred_region
        %s1054 = smul.u32 2, %s22
      $region60: #{q_critic_forward.1} parent=55 // pred_fallthru
        _
    $region56: #{q_critic_forward.1} parent=5 // pred_fallthru
      _
    %p1055 = scmp.le.s32.totalorder 2, %s17
    // Predicated region
    $region61: #{q_critic_forward.1} parent=5 // pred_check
      %p1056 = pneg %p1055
    $region62: #{q_critic_forward.1} parent=5 // pred_check_branch
      %1058 = sbr.rel (%p1056) target = $region64
    $region63: #{q_critic_forward.1} parent=5 // pred_region
      %s1059 = ssub.s32 %s17, 2
      // Predicated region
      $region65: #{q_critic_forward.1} parent=63 // pred_check
        %p1060 = pneg %p245
      $region66: #{q_critic_forward.1} parent=63 // pred_check_branch
        %1062 = sbr.rel (%p1060) target = $region68
      $region67: #{q_critic_forward.1} parent=63 // pred_region
        %s1063 = smul.u32 2, %s23
        %p1064 = scmp.lt.s32.totalorder %s1063, 3
        %s1065 = scalar_select %p1064, %s1063, 3
        %s1066 = smul.addr %s1065, 8
        %s1067 = scalar_lea.vmem %s9, %s1066
      $region68: #{q_critic_forward.1} parent=63 // pred_fallthru
        _
    $region64: #{q_critic_forward.1} parent=5 // pred_fallthru
      _
  $region6: #{q_critic_forward.1} parent=0 // loop_footer
    %s21 = sadd.s32 1, %s17
  $region7: #{q_critic_forward.1} parent=0 // loop_footer_branch
    %16 = sbr.rel target = $region3
  $region8: #{q_critic_forward.1} parent=0 // loop_exit
    _

</llo_original>
